<compile_context>
chip_gen: v5e
topology: v5e:2x2
jax: 0.10.0
libtpu: 0.0.40
codegen_flags: <defaults>
</compile_context>

<pallas_src>
import jax
import jax.numpy as jnp
from jax.experimental import pallas as pl
from jax.experimental.pallas import tpu as pltpu


def _hedge_kernel(x_ref, w1_ref, b1_ref, w2_ref, b2_ref, out_ref):
    """x_ref  : [(T+1)*A, Bt] f32   (flattened time*asset rows, batch on lanes)
       w1_ref : [T, nodes, A]  (compute dtype)    b1_ref: [T, nodes, 1] f32
       w2_ref : [T, A, nodes]  (compute dtype)    b2_ref: [T, A, 1]     f32
       out_ref: [2*A, Bt]  — rows [0:A] = final price, rows [A:2A] = hedge."""
    T, nodes, A = w1_ref.shape
    cd = w1_ref.dtype                     # compute dtype (bf16 or f32)

    price = x_ref[0:A, :].astype(jnp.float32)        # [A, Bt]
    hedge = jnp.zeros(price.shape, jnp.float32)      # f32 accumulator

    # Static unroll over time steps (T is a trace-time constant).
    for j in range(T):
        # DenseLayer j, computed transposed so batch stays on the lane axis:
        #   h        = tanh(W1 @ price + b1)   [nodes, Bt]
        #   strategy = W2 @ h + b2             [A, Bt]
        h = jnp.dot(w1_ref[j], price.astype(cd),
                    preferred_element_type=jnp.float32) + b1_ref[j]
        h = jnp.tanh(h.astype(cd))          # bf16 tanh -> fast EUP path (v6e/v7x)
        strategy = jnp.dot(w2_ref[j], h,
                           preferred_element_type=jnp.float32) + b2_ref[j]

        pricenew = x_ref[(j + 1) * A:(j + 2) * A, :].astype(jnp.float32)
        hedge = hedge + strategy * (pricenew - price)   # f32 throughout
        price = pricenew

    out_ref[...] = jnp.concatenate([price, hedge], axis=0).astype(out_ref.dtype)


def _batch_tiling(batch, cap=16384):
    """Choose (batch_tile, num_tiles): lane-dense tiles (multiple of 128),
    capped so per-tile VMEM stays well under the smallest scoped limit
    (v5e: 16 MiB), with >= 2 tiles whenever the batch allows so the
    'parallel' grid axis can feed both of v7x's TensorCores."""
    if batch <= 128:
        return 128, 1
    n = max(2, -(-batch // cap))             # number of tiles
    bt = 128 * (-(-batch // (n * 128)))      # tile size, multiple of 128, <= cap
    return bt, n


def hedge_network(x, w1, b1, w2, b2, *, compute_dtype=jnp.bfloat16,
                  batch_tile_cap=16384, lane_major_output=False):
    """x: [B, T+1, A] (torch axis convention).
       Weights stacked per time step in torch-native [out, in] layout:
         w1: [T, nodes, A], b1: [T, nodes], w2: [T, A, nodes], b2: [T, A].
       Returns (price, hedge), each [B, A] (or [A, B] if lane_major_output)."""
    B, Tp1, A = x.shape
    T = Tp1 - 1
    nodes = w1.shape[1]

    bt, n_bt = _batch_tiling(B, batch_tile_cap)
    b_pad = bt * n_bt

    # Lane-dense, flattened price slab [(T+1)*A, B_pad]; row index = t*A + a.
    x_flat = jnp.transpose(x, (1, 2, 0)).reshape(Tp1 * A, B)
    if b_pad != B:
        x_flat = jnp.pad(x_flat, ((0, 0), (0, b_pad - B)))

    # Weights once-cast to the compute dtype; biases stay f32 (added post-dot).
    w1c = w1.astype(compute_dtype)
    w2c = w2.astype(compute_dtype)
    b1r = b1.reshape(T, nodes, 1).astype(jnp.float32)
    b2r = b2.reshape(T, A, 1).astype(jnp.float32)

    packed = pl.pallas_call(
        _hedge_kernel,
        out_shape=jax.ShapeDtypeStruct((2 * A, b_pad), x.dtype),
        grid_spec=pltpu.PrefetchScalarGridSpec(
            num_scalar_prefetch=0,
            grid=(n_bt,),                                       # batch tiles only
            in_specs=[
                pl.BlockSpec((Tp1 * A, bt), lambda i: (0, i)),     # price paths
                pl.BlockSpec((T, nodes, A), lambda i: (0, 0, 0)),  # all W1 (resident)
                pl.BlockSpec((T, nodes, 1), lambda i: (0, 0, 0)),  # all b1 (resident)
                pl.BlockSpec((T, A, nodes), lambda i: (0, 0, 0)),  # all W2 (resident)
                pl.BlockSpec((T, A, 1), lambda i: (0, 0, 0)),      # all b2 (resident)
            ],
            out_specs=pl.BlockSpec((2 * A, bt), lambda i: (0, i)),  # packed output
        ),
        compiler_params=pltpu.CompilerParams(
            dimension_semantics=("parallel",)),   # batch tiles split across TCs
    )(x_flat, w1c, b1r, w2c, b2r)

    price_t = packed[:A, :B]          # [A, B]
    hedge_t = packed[A:, :B]          # [A, B]
    if lane_major_output:
        return price_t, hedge_t
    return price_t.T, hedge_t.T       # torch convention [B, A]


def hedge_network_ref(x, w1, b1, w2, b2):
    """Pure-JAX f32 reference mirroring the PyTorch forward exactly
    (weights in torch [out, in] layout, y = x @ W.T + b)."""
    T = x.shape[1] - 1
    price = x[:, 0, :]
    hedge = jnp.zeros_like(price)
    for j in range(T):
        h = jnp.tanh(price @ w1[j].T + b1[j])
        strategy = h @ w2[j].T + b2[j]
        pricenew = x[:, j + 1, :]
        hedge = hedge + strategy * (pricenew - price)
        price = pricenew
    return price, hedge


def init_params(key, time_steps, num_assets, nodes):
    """Deterministic init mimicking torch.nn.Linear (uniform +-1/sqrt(fan_in)),
    stored in torch-native [out_features, in_features] layout."""
    k1, k2, k3, k4 = jax.random.split(key, 4)
    lim1 = 1.0 / jnp.sqrt(jnp.float32(num_assets))
    lim2 = 1.0 / jnp.sqrt(jnp.float32(nodes))
    w1 = jax.random.uniform(k1, (time_steps, nodes, num_assets),
                            jnp.float32, -lim1, lim1)
    b1 = jax.random.uniform(k2, (time_steps, nodes),
                            jnp.float32, -lim1, lim1)
    w2 = jax.random.uniform(k3, (time_steps, num_assets, nodes),
                            jnp.float32, -lim2, lim2)
    b2 = jax.random.uniform(k4, (time_steps, num_assets),
                            jnp.float32, -lim2, lim2)
    return w1, b1, w2, b2


if __name__ == "__main__":
    time_steps = 10
    num_assets = 4
    nodes = 32
    batch = 8

    key = jax.random.PRNGKey(0)
    kx, kp = jax.random.split(key)
    # x: [batch, time_steps + 1, num_assets] (same axis convention as torch)
    x = 1.0 + 0.1 * jax.random.normal(
        kx, (batch, time_steps + 1, num_assets), jnp.float32)
    w1, b1, w2, b2 = init_params(kp, time_steps, num_assets, nodes)

    price_ref, hedge_ref = hedge_network_ref(x, w1, b1, w2, b2)

    # 1) f32 compute path: must match the torch-equivalent reference tightly.
    run_f32 = jax.jit(lambda *a: hedge_network(*a, compute_dtype=jnp.float32))
    price32, hedge32 = run_f32(x, w1, b1, w2, b2)
    price32 = jax.block_until_ready(price32)
    hedge32 = jax.block_until_ready(hedge32)
    assert price32.shape == (batch, num_assets)
    assert jnp.allclose(price32, price_ref, atol=1e-5), "f32 price mismatch"
    assert jnp.allclose(hedge32, hedge_ref, atol=1e-4), "f32 hedge mismatch"

    # 2) Default mixed-precision path (bf16 matmuls + tanh, f32 accumulation).
    #    Final price is copied straight from x, so it remains exact; hedge is
    #    compared at a bf16-appropriate tolerance.
    run_bf16 = jax.jit(hedge_network)
    price_bf, hedge_bf = run_bf16(x, w1, b1, w2, b2)
    price_bf = jax.block_until_ready(price_bf)
    hedge_bf = jax.block_until_ready(hedge_bf)
    assert jnp.allclose(price_bf, price_ref, atol=1e-5), "bf16 price mismatch"
    assert jnp.allclose(hedge_bf, hedge_ref, atol=3e-2), "bf16 hedge mismatch"

    print("KERNEL_OK")
</pallas_src>

<mosaic_0001>
module attributes {stable_mosaic.version = 11 : i64} {
  func.func @_hedge_kernel(%arg0: i32, %arg1: memref<44x128xf32, #tpu.memory_space<vmem>>, %arg2: memref<10x32x4xf32, #tpu.memory_space<vmem>>, %arg3: memref<10x32x1xf32, #tpu.memory_space<vmem>>, %arg4: memref<10x4x32xf32, #tpu.memory_space<vmem>>, %arg5: memref<10x4x1xf32, #tpu.memory_space<vmem>>, %arg6: memref<8x128xf32, #tpu.memory_space<vmem>>) attributes {dimension_semantics = [#tpu.dimension_semantics<parallel>], iteration_bounds = array<i64: 1>, scalar_prefetch = 0 : i64, scratch_operands = 0 : i64, tpu.core_type = #tpu.core_type<tc>, window_params = [{transform_indices = @transform_0, window_bounds = array<i64: 44, 128>}, {pipeline_mode = #tpu.pipeline_mode<synchronous>, transform_indices = @transform_1, window_bounds = array<i64: 10, 32, 4>}, {pipeline_mode = #tpu.pipeline_mode<synchronous>, transform_indices = @transform_2, window_bounds = array<i64: 10, 32, 1>}, {pipeline_mode = #tpu.pipeline_mode<synchronous>, transform_indices = @transform_3, window_bounds = array<i64: 10, 4, 32>}, {pipeline_mode = #tpu.pipeline_mode<synchronous>, transform_indices = @transform_4, window_bounds = array<i64: 10, 4, 1>}, {transform_indices = @transform_5, window_bounds = array<i64: 8, 128>}]} {
    %c0 = arith.constant 0 : index
    %c0_0 = arith.constant 0 : index
    %0 = vector.load %arg1[%c0, %c0_0] : memref<44x128xf32, #tpu.memory_space<vmem>>, vector<4x128xf32>
    %cst = arith.constant 0.000000e+00 : f32
    %1 = vector.broadcast %cst : f32 to vector<4x128xf32>
    %c0_1 = arith.constant 0 : index
    %c0_2 = arith.constant 0 : index
    %c0_3 = arith.constant 0 : index
    %2 = vector.load %arg2[%c0_1, %c0_2, %c0_3] : memref<10x32x4xf32, #tpu.memory_space<vmem>>, vector<1x32x4xf32>
    %3 = vector.shape_cast %2 : vector<1x32x4xf32> to vector<32x4xf32>
    %cst_4 = arith.constant dense<0.000000e+00> : vector<32x128xf32>
    %4 = tpu.matmul %3, %0, %cst_4 {dimension_numbers = #tpu.dot_dimension_numbers<[1], [0], [0], [1], [0, 0, 1, 1], [], []>} : vector<32x4xf32>, vector<4x128xf32>, vector<32x128xf32> -> vector<32x128xf32>
    %c0_5 = arith.constant 0 : index
    %c0_6 = arith.constant 0 : index
    %c0_7 = arith.constant 0 : index
    %5 = vector.load %arg3[%c0_5, %c0_6, %c0_7] : memref<10x32x1xf32, #tpu.memory_space<vmem>>, vector<1x32x1xf32>
    %6 = vector.shape_cast %5 : vector<1x32x1xf32> to vector<32x1xf32>
    %7 = vector.broadcast %6 : vector<32x1xf32> to vector<32x128xf32>
    %8 = arith.addf %4, %7 : vector<32x128xf32>
    %9 = math.tanh %8 : vector<32x128xf32>
    %c0_8 = arith.constant 0 : index
    %c0_9 = arith.constant 0 : index
    %c0_10 = arith.constant 0 : index
    %10 = vector.load %arg4[%c0_8, %c0_9, %c0_10] : memref<10x4x32xf32, #tpu.memory_space<vmem>>, vector<1x4x32xf32>
    %11 = vector.shape_cast %10 : vector<1x4x32xf32> to vector<4x32xf32>
    %cst_11 = arith.constant dense<0.000000e+00> : vector<4x128xf32>
    %12 = tpu.matmul %11, %9, %cst_11 {dimension_numbers = #tpu.dot_dimension_numbers<[1], [0], [0], [1], [0, 0, 1, 1], [], []>} : vector<4x32xf32>, vector<32x128xf32>, vector<4x128xf32> -> vector<4x128xf32>
    %c0_12 = arith.constant 0 : index
    %c0_13 = arith.constant 0 : index
    %c0_14 = arith.constant 0 : index
    %13 = vector.load %arg5[%c0_12, %c0_13, %c0_14] : memref<10x4x1xf32, #tpu.memory_space<vmem>>, vector<1x4x1xf32>
    %14 = vector.shape_cast %13 : vector<1x4x1xf32> to vector<4x1xf32>
    %15 = vector.broadcast %14 : vector<4x1xf32> to vector<4x128xf32>
    %16 = arith.addf %12, %15 : vector<4x128xf32>
    %c4 = arith.constant 4 : index
    %c0_15 = arith.constant 0 : index
    %17 = vector.load %arg1[%c4, %c0_15] : memref<44x128xf32, #tpu.memory_space<vmem>>, vector<4x128xf32>
    %18 = arith.subf %17, %0 : vector<4x128xf32>
    %19 = arith.mulf %16, %18 : vector<4x128xf32>
    %20 = arith.addf %1, %19 : vector<4x128xf32>
    %c1 = arith.constant 1 : index
    %c0_16 = arith.constant 0 : index
    %c0_17 = arith.constant 0 : index
    %21 = vector.load %arg2[%c1, %c0_16, %c0_17] : memref<10x32x4xf32, #tpu.memory_space<vmem>>, vector<1x32x4xf32>
    %22 = vector.shape_cast %21 : vector<1x32x4xf32> to vector<32x4xf32>
    %cst_18 = arith.constant dense<0.000000e+00> : vector<32x128xf32>
    %23 = tpu.matmul %22, %17, %cst_18 {dimension_numbers = #tpu.dot_dimension_numbers<[1], [0], [0], [1], [0, 0, 1, 1], [], []>} : vector<32x4xf32>, vector<4x128xf32>, vector<32x128xf32> -> vector<32x128xf32>
    %c1_19 = arith.constant 1 : index
    %c0_20 = arith.constant 0 : index
    %c0_21 = arith.constant 0 : index
    %24 = vector.load %arg3[%c1_19, %c0_20, %c0_21] : memref<10x32x1xf32, #tpu.memory_space<vmem>>, vector<1x32x1xf32>
    %25 = vector.shape_cast %24 : vector<1x32x1xf32> to vector<32x1xf32>
    %26 = vector.broadcast %25 : vector<32x1xf32> to vector<32x128xf32>
    %27 = arith.addf %23, %26 : vector<32x128xf32>
    %28 = math.tanh %27 : vector<32x128xf32>
    %c1_22 = arith.constant 1 : index
    %c0_23 = arith.constant 0 : index
    %c0_24 = arith.constant 0 : index
    %29 = vector.load %arg4[%c1_22, %c0_23, %c0_24] : memref<10x4x32xf32, #tpu.memory_space<vmem>>, vector<1x4x32xf32>
    %30 = vector.shape_cast %29 : vector<1x4x32xf32> to vector<4x32xf32>
    %cst_25 = arith.constant dense<0.000000e+00> : vector<4x128xf32>
    %31 = tpu.matmul %30, %28, %cst_25 {dimension_numbers = #tpu.dot_dimension_numbers<[1], [0], [0], [1], [0, 0, 1, 1], [], []>} : vector<4x32xf32>, vector<32x128xf32>, vector<4x128xf32> -> vector<4x128xf32>
    %c1_26 = arith.constant 1 : index
    %c0_27 = arith.constant 0 : index
    %c0_28 = arith.constant 0 : index
    %32 = vector.load %arg5[%c1_26, %c0_27, %c0_28] : memref<10x4x1xf32, #tpu.memory_space<vmem>>, vector<1x4x1xf32>
    %33 = vector.shape_cast %32 : vector<1x4x1xf32> to vector<4x1xf32>
    %34 = vector.broadcast %33 : vector<4x1xf32> to vector<4x128xf32>
    %35 = arith.addf %31, %34 : vector<4x128xf32>
    %c8 = arith.constant 8 : index
    %c0_29 = arith.constant 0 : index
    %36 = vector.load %arg1[%c8, %c0_29] : memref<44x128xf32, #tpu.memory_space<vmem>>, vector<4x128xf32>
    %37 = arith.subf %36, %17 : vector<4x128xf32>
    %38 = arith.mulf %35, %37 : vector<4x128xf32>
    %39 = arith.addf %20, %38 : vector<4x128xf32>
    %c2 = arith.constant 2 : index
    %c0_30 = arith.constant 0 : index
    %c0_31 = arith.constant 0 : index
    %40 = vector.load %arg2[%c2, %c0_30, %c0_31] : memref<10x32x4xf32, #tpu.memory_space<vmem>>, vector<1x32x4xf32>
    %41 = vector.shape_cast %40 : vector<1x32x4xf32> to vector<32x4xf32>
    %cst_32 = arith.constant dense<0.000000e+00> : vector<32x128xf32>
    %42 = tpu.matmul %41, %36, %cst_32 {dimension_numbers = #tpu.dot_dimension_numbers<[1], [0], [0], [1], [0, 0, 1, 1], [], []>} : vector<32x4xf32>, vector<4x128xf32>, vector<32x128xf32> -> vector<32x128xf32>
    %c2_33 = arith.constant 2 : index
    %c0_34 = arith.constant 0 : index
    %c0_35 = arith.constant 0 : index
    %43 = vector.load %arg3[%c2_33, %c0_34, %c0_35] : memref<10x32x1xf32, #tpu.memory_space<vmem>>, vector<1x32x1xf32>
    %44 = vector.shape_cast %43 : vector<1x32x1xf32> to vector<32x1xf32>
    %45 = vector.broadcast %44 : vector<32x1xf32> to vector<32x128xf32>
    %46 = arith.addf %42, %45 : vector<32x128xf32>
    %47 = math.tanh %46 : vector<32x128xf32>
    %c2_36 = arith.constant 2 : index
    %c0_37 = arith.constant 0 : index
    %c0_38 = arith.constant 0 : index
    %48 = vector.load %arg4[%c2_36, %c0_37, %c0_38] : memref<10x4x32xf32, #tpu.memory_space<vmem>>, vector<1x4x32xf32>
    %49 = vector.shape_cast %48 : vector<1x4x32xf32> to vector<4x32xf32>
    %cst_39 = arith.constant dense<0.000000e+00> : vector<4x128xf32>
    %50 = tpu.matmul %49, %47, %cst_39 {dimension_numbers = #tpu.dot_dimension_numbers<[1], [0], [0], [1], [0, 0, 1, 1], [], []>} : vector<4x32xf32>, vector<32x128xf32>, vector<4x128xf32> -> vector<4x128xf32>
    %c2_40 = arith.constant 2 : index
    %c0_41 = arith.constant 0 : index
    %c0_42 = arith.constant 0 : index
    %51 = vector.load %arg5[%c2_40, %c0_41, %c0_42] : memref<10x4x1xf32, #tpu.memory_space<vmem>>, vector<1x4x1xf32>
    %52 = vector.shape_cast %51 : vector<1x4x1xf32> to vector<4x1xf32>
    %53 = vector.broadcast %52 : vector<4x1xf32> to vector<4x128xf32>
    %54 = arith.addf %50, %53 : vector<4x128xf32>
    %c12 = arith.constant 12 : index
    %c0_43 = arith.constant 0 : index
    %55 = vector.load %arg1[%c12, %c0_43] : memref<44x128xf32, #tpu.memory_space<vmem>>, vector<4x128xf32>
    %56 = arith.subf %55, %36 : vector<4x128xf32>
    %57 = arith.mulf %54, %56 : vector<4x128xf32>
    %58 = arith.addf %39, %57 : vector<4x128xf32>
    %c3 = arith.constant 3 : index
    %c0_44 = arith.constant 0 : index
    %c0_45 = arith.constant 0 : index
    %59 = vector.load %arg2[%c3, %c0_44, %c0_45] : memref<10x32x4xf32, #tpu.memory_space<vmem>>, vector<1x32x4xf32>
    %60 = vector.shape_cast %59 : vector<1x32x4xf32> to vector<32x4xf32>
    %cst_46 = arith.constant dense<0.000000e+00> : vector<32x128xf32>
    %61 = tpu.matmul %60, %55, %cst_46 {dimension_numbers = #tpu.dot_dimension_numbers<[1], [0], [0], [1], [0, 0, 1, 1], [], []>} : vector<32x4xf32>, vector<4x128xf32>, vector<32x128xf32> -> vector<32x128xf32>
    %c3_47 = arith.constant 3 : index
    %c0_48 = arith.constant 0 : index
    %c0_49 = arith.constant 0 : index
    %62 = vector.load %arg3[%c3_47, %c0_48, %c0_49] : memref<10x32x1xf32, #tpu.memory_space<vmem>>, vector<1x32x1xf32>
    %63 = vector.shape_cast %62 : vector<1x32x1xf32> to vector<32x1xf32>
    %64 = vector.broadcast %63 : vector<32x1xf32> to vector<32x128xf32>
    %65 = arith.addf %61, %64 : vector<32x128xf32>
    %66 = math.tanh %65 : vector<32x128xf32>
    %c3_50 = arith.constant 3 : index
    %c0_51 = arith.constant 0 : index
    %c0_52 = arith.constant 0 : index
    %67 = vector.load %arg4[%c3_50, %c0_51, %c0_52] : memref<10x4x32xf32, #tpu.memory_space<vmem>>, vector<1x4x32xf32>
    %68 = vector.shape_cast %67 : vector<1x4x32xf32> to vector<4x32xf32>
    %cst_53 = arith.constant dense<0.000000e+00> : vector<4x128xf32>
    %69 = tpu.matmul %68, %66, %cst_53 {dimension_numbers = #tpu.dot_dimension_numbers<[1], [0], [0], [1], [0, 0, 1, 1], [], []>} : vector<4x32xf32>, vector<32x128xf32>, vector<4x128xf32> -> vector<4x128xf32>
    %c3_54 = arith.constant 3 : index
    %c0_55 = arith.constant 0 : index
    %c0_56 = arith.constant 0 : index
    %70 = vector.load %arg5[%c3_54, %c0_55, %c0_56] : memref<10x4x1xf32, #tpu.memory_space<vmem>>, vector<1x4x1xf32>
    %71 = vector.shape_cast %70 : vector<1x4x1xf32> to vector<4x1xf32>
    %72 = vector.broadcast %71 : vector<4x1xf32> to vector<4x128xf32>
    %73 = arith.addf %69, %72 : vector<4x128xf32>
    %c16 = arith.constant 16 : index
    %c0_57 = arith.constant 0 : index
    %74 = vector.load %arg1[%c16, %c0_57] : memref<44x128xf32, #tpu.memory_space<vmem>>, vector<4x128xf32>
    %75 = arith.subf %74, %55 : vector<4x128xf32>
    %76 = arith.mulf %73, %75 : vector<4x128xf32>
    %77 = arith.addf %58, %76 : vector<4x128xf32>
    %c4_58 = arith.constant 4 : index
    %c0_59 = arith.constant 0 : index
    %c0_60 = arith.constant 0 : index
    %78 = vector.load %arg2[%c4_58, %c0_59, %c0_60] : memref<10x32x4xf32, #tpu.memory_space<vmem>>, vector<1x32x4xf32>
    %79 = vector.shape_cast %78 : vector<1x32x4xf32> to vector<32x4xf32>
    %cst_61 = arith.constant dense<0.000000e+00> : vector<32x128xf32>
    %80 = tpu.matmul %79, %74, %cst_61 {dimension_numbers = #tpu.dot_dimension_numbers<[1], [0], [0], [1], [0, 0, 1, 1], [], []>} : vector<32x4xf32>, vector<4x128xf32>, vector<32x128xf32> -> vector<32x128xf32>
    %c4_62 = arith.constant 4 : index
    %c0_63 = arith.constant 0 : index
    %c0_64 = arith.constant 0 : index
    %81 = vector.load %arg3[%c4_62, %c0_63, %c0_64] : memref<10x32x1xf32, #tpu.memory_space<vmem>>, vector<1x32x1xf32>
    %82 = vector.shape_cast %81 : vector<1x32x1xf32> to vector<32x1xf32>
    %83 = vector.broadcast %82 : vector<32x1xf32> to vector<32x128xf32>
    %84 = arith.addf %80, %83 : vector<32x128xf32>
    %85 = math.tanh %84 : vector<32x128xf32>
    %c4_65 = arith.constant 4 : index
    %c0_66 = arith.constant 0 : index
    %c0_67 = arith.constant 0 : index
    %86 = vector.load %arg4[%c4_65, %c0_66, %c0_67] : memref<10x4x32xf32, #tpu.memory_space<vmem>>, vector<1x4x32xf32>
    %87 = vector.shape_cast %86 : vector<1x4x32xf32> to vector<4x32xf32>
    %cst_68 = arith.constant dense<0.000000e+00> : vector<4x128xf32>
    %88 = tpu.matmul %87, %85, %cst_68 {dimension_numbers = #tpu.dot_dimension_numbers<[1], [0], [0], [1], [0, 0, 1, 1], [], []>} : vector<4x32xf32>, vector<32x128xf32>, vector<4x128xf32> -> vector<4x128xf32>
    %c4_69 = arith.constant 4 : index
    %c0_70 = arith.constant 0 : index
    %c0_71 = arith.constant 0 : index
    %89 = vector.load %arg5[%c4_69, %c0_70, %c0_71] : memref<10x4x1xf32, #tpu.memory_space<vmem>>, vector<1x4x1xf32>
    %90 = vector.shape_cast %89 : vector<1x4x1xf32> to vector<4x1xf32>
    %91 = vector.broadcast %90 : vector<4x1xf32> to vector<4x128xf32>
    %92 = arith.addf %88, %91 : vector<4x128xf32>
    %c20 = arith.constant 20 : index
    %c0_72 = arith.constant 0 : index
    %93 = vector.load %arg1[%c20, %c0_72] : memref<44x128xf32, #tpu.memory_space<vmem>>, vector<4x128xf32>
    %94 = arith.subf %93, %74 : vector<4x128xf32>
    %95 = arith.mulf %92, %94 : vector<4x128xf32>
    %96 = arith.addf %77, %95 : vector<4x128xf32>
    %c5 = arith.constant 5 : index
    %c0_73 = arith.constant 0 : index
    %c0_74 = arith.constant 0 : index
    %97 = vector.load %arg2[%c5, %c0_73, %c0_74] : memref<10x32x4xf32, #tpu.memory_space<vmem>>, vector<1x32x4xf32>
    %98 = vector.shape_cast %97 : vector<1x32x4xf32> to vector<32x4xf32>
    %cst_75 = arith.constant dense<0.000000e+00> : vector<32x128xf32>
    %99 = tpu.matmul %98, %93, %cst_75 {dimension_numbers = #tpu.dot_dimension_numbers<[1], [0], [0], [1], [0, 0, 1, 1], [], []>} : vector<32x4xf32>, vector<4x128xf32>, vector<32x128xf32> -> vector<32x128xf32>
    %c5_76 = arith.constant 5 : index
    %c0_77 = arith.constant 0 : index
    %c0_78 = arith.constant 0 : index
    %100 = vector.load %arg3[%c5_76, %c0_77, %c0_78] : memref<10x32x1xf32, #tpu.memory_space<vmem>>, vector<1x32x1xf32>
    %101 = vector.shape_cast %100 : vector<1x32x1xf32> to vector<32x1xf32>
    %102 = vector.broadcast %101 : vector<32x1xf32> to vector<32x128xf32>
    %103 = arith.addf %99, %102 : vector<32x128xf32>
    %104 = math.tanh %103 : vector<32x128xf32>
    %c5_79 = arith.constant 5 : index
    %c0_80 = arith.constant 0 : index
    %c0_81 = arith.constant 0 : index
    %105 = vector.load %arg4[%c5_79, %c0_80, %c0_81] : memref<10x4x32xf32, #tpu.memory_space<vmem>>, vector<1x4x32xf32>
    %106 = vector.shape_cast %105 : vector<1x4x32xf32> to vector<4x32xf32>
    %cst_82 = arith.constant dense<0.000000e+00> : vector<4x128xf32>
    %107 = tpu.matmul %106, %104, %cst_82 {dimension_numbers = #tpu.dot_dimension_numbers<[1], [0], [0], [1], [0, 0, 1, 1], [], []>} : vector<4x32xf32>, vector<32x128xf32>, vector<4x128xf32> -> vector<4x128xf32>
    %c5_83 = arith.constant 5 : index
    %c0_84 = arith.constant 0 : index
    %c0_85 = arith.constant 0 : index
    %108 = vector.load %arg5[%c5_83, %c0_84, %c0_85] : memref<10x4x1xf32, #tpu.memory_space<vmem>>, vector<1x4x1xf32>
    %109 = vector.shape_cast %108 : vector<1x4x1xf32> to vector<4x1xf32>
    %110 = vector.broadcast %109 : vector<4x1xf32> to vector<4x128xf32>
    %111 = arith.addf %107, %110 : vector<4x128xf32>
    %c24 = arith.constant 24 : index
    %c0_86 = arith.constant 0 : index
    %112 = vector.load %arg1[%c24, %c0_86] : memref<44x128xf32, #tpu.memory_space<vmem>>, vector<4x128xf32>
    %113 = arith.subf %112, %93 : vector<4x128xf32>
    %114 = arith.mulf %111, %113 : vector<4x128xf32>
    %115 = arith.addf %96, %114 : vector<4x128xf32>
    %c6 = arith.constant 6 : index
    %c0_87 = arith.constant 0 : index
    %c0_88 = arith.constant 0 : index
    %116 = vector.load %arg2[%c6, %c0_87, %c0_88] : memref<10x32x4xf32, #tpu.memory_space<vmem>>, vector<1x32x4xf32>
    %117 = vector.shape_cast %116 : vector<1x32x4xf32> to vector<32x4xf32>
    %cst_89 = arith.constant dense<0.000000e+00> : vector<32x128xf32>
    %118 = tpu.matmul %117, %112, %cst_89 {dimension_numbers = #tpu.dot_dimension_numbers<[1], [0], [0], [1], [0, 0, 1, 1], [], []>} : vector<32x4xf32>, vector<4x128xf32>, vector<32x128xf32> -> vector<32x128xf32>
    %c6_90 = arith.constant 6 : index
    %c0_91 = arith.constant 0 : index
    %c0_92 = arith.constant 0 : index
    %119 = vector.load %arg3[%c6_90, %c0_91, %c0_92] : memref<10x32x1xf32, #tpu.memory_space<vmem>>, vector<1x32x1xf32>
    %120 = vector.shape_cast %119 : vector<1x32x1xf32> to vector<32x1xf32>
    %121 = vector.broadcast %120 : vector<32x1xf32> to vector<32x128xf32>
    %122 = arith.addf %118, %121 : vector<32x128xf32>
    %123 = math.tanh %122 : vector<32x128xf32>
    %c6_93 = arith.constant 6 : index
    %c0_94 = arith.constant 0 : index
    %c0_95 = arith.constant 0 : index
    %124 = vector.load %arg4[%c6_93, %c0_94, %c0_95] : memref<10x4x32xf32, #tpu.memory_space<vmem>>, vector<1x4x32xf32>
    %125 = vector.shape_cast %124 : vector<1x4x32xf32> to vector<4x32xf32>
    %cst_96 = arith.constant dense<0.000000e+00> : vector<4x128xf32>
    %126 = tpu.matmul %125, %123, %cst_96 {dimension_numbers = #tpu.dot_dimension_numbers<[1], [0], [0], [1], [0, 0, 1, 1], [], []>} : vector<4x32xf32>, vector<32x128xf32>, vector<4x128xf32> -> vector<4x128xf32>
    %c6_97 = arith.constant 6 : index
    %c0_98 = arith.constant 0 : index
    %c0_99 = arith.constant 0 : index
    %127 = vector.load %arg5[%c6_97, %c0_98, %c0_99] : memref<10x4x1xf32, #tpu.memory_space<vmem>>, vector<1x4x1xf32>
    %128 = vector.shape_cast %127 : vector<1x4x1xf32> to vector<4x1xf32>
    %129 = vector.broadcast %128 : vector<4x1xf32> to vector<4x128xf32>
    %130 = arith.addf %126, %129 : vector<4x128xf32>
    %c28 = arith.constant 28 : index
    %c0_100 = arith.constant 0 : index
    %131 = vector.load %arg1[%c28, %c0_100] : memref<44x128xf32, #tpu.memory_space<vmem>>, vector<4x128xf32>
    %132 = arith.subf %131, %112 : vector<4x128xf32>
    %133 = arith.mulf %130, %132 : vector<4x128xf32>
    %134 = arith.addf %115, %133 : vector<4x128xf32>
    %c7 = arith.constant 7 : index
    %c0_101 = arith.constant 0 : index
    %c0_102 = arith.constant 0 : index
    %135 = vector.load %arg2[%c7, %c0_101, %c0_102] : memref<10x32x4xf32, #tpu.memory_space<vmem>>, vector<1x32x4xf32>
    %136 = vector.shape_cast %135 : vector<1x32x4xf32> to vector<32x4xf32>
    %cst_103 = arith.constant dense<0.000000e+00> : vector<32x128xf32>
    %137 = tpu.matmul %136, %131, %cst_103 {dimension_numbers = #tpu.dot_dimension_numbers<[1], [0], [0], [1], [0, 0, 1, 1], [], []>} : vector<32x4xf32>, vector<4x128xf32>, vector<32x128xf32> -> vector<32x128xf32>
    %c7_104 = arith.constant 7 : index
    %c0_105 = arith.constant 0 : index
    %c0_106 = arith.constant 0 : index
    %138 = vector.load %arg3[%c7_104, %c0_105, %c0_106] : memref<10x32x1xf32, #tpu.memory_space<vmem>>, vector<1x32x1xf32>
    %139 = vector.shape_cast %138 : vector<1x32x1xf32> to vector<32x1xf32>
    %140 = vector.broadcast %139 : vector<32x1xf32> to vector<32x128xf32>
    %141 = arith.addf %137, %140 : vector<32x128xf32>
    %142 = math.tanh %141 : vector<32x128xf32>
    %c7_107 = arith.constant 7 : index
    %c0_108 = arith.constant 0 : index
    %c0_109 = arith.constant 0 : index
    %143 = vector.load %arg4[%c7_107, %c0_108, %c0_109] : memref<10x4x32xf32, #tpu.memory_space<vmem>>, vector<1x4x32xf32>
    %144 = vector.shape_cast %143 : vector<1x4x32xf32> to vector<4x32xf32>
    %cst_110 = arith.constant dense<0.000000e+00> : vector<4x128xf32>
    %145 = tpu.matmul %144, %142, %cst_110 {dimension_numbers = #tpu.dot_dimension_numbers<[1], [0], [0], [1], [0, 0, 1, 1], [], []>} : vector<4x32xf32>, vector<32x128xf32>, vector<4x128xf32> -> vector<4x128xf32>
    %c7_111 = arith.constant 7 : index
    %c0_112 = arith.constant 0 : index
    %c0_113 = arith.constant 0 : index
    %146 = vector.load %arg5[%c7_111, %c0_112, %c0_113] : memref<10x4x1xf32, #tpu.memory_space<vmem>>, vector<1x4x1xf32>
    %147 = vector.shape_cast %146 : vector<1x4x1xf32> to vector<4x1xf32>
    %148 = vector.broadcast %147 : vector<4x1xf32> to vector<4x128xf32>
    %149 = arith.addf %145, %148 : vector<4x128xf32>
    %c32 = arith.constant 32 : index
    %c0_114 = arith.constant 0 : index
    %150 = vector.load %arg1[%c32, %c0_114] : memref<44x128xf32, #tpu.memory_space<vmem>>, vector<4x128xf32>
    %151 = arith.subf %150, %131 : vector<4x128xf32>
    %152 = arith.mulf %149, %151 : vector<4x128xf32>
    %153 = arith.addf %134, %152 : vector<4x128xf32>
    %c8_115 = arith.constant 8 : index
    %c0_116 = arith.constant 0 : index
    %c0_117 = arith.constant 0 : index
    %154 = vector.load %arg2[%c8_115, %c0_116, %c0_117] : memref<10x32x4xf32, #tpu.memory_space<vmem>>, vector<1x32x4xf32>
    %155 = vector.shape_cast %154 : vector<1x32x4xf32> to vector<32x4xf32>
    %cst_118 = arith.constant dense<0.000000e+00> : vector<32x128xf32>
    %156 = tpu.matmul %155, %150, %cst_118 {dimension_numbers = #tpu.dot_dimension_numbers<[1], [0], [0], [1], [0, 0, 1, 1], [], []>} : vector<32x4xf32>, vector<4x128xf32>, vector<32x128xf32> -> vector<32x128xf32>
    %c8_119 = arith.constant 8 : index
    %c0_120 = arith.constant 0 : index
    %c0_121 = arith.constant 0 : index
    %157 = vector.load %arg3[%c8_119, %c0_120, %c0_121] : memref<10x32x1xf32, #tpu.memory_space<vmem>>, vector<1x32x1xf32>
    %158 = vector.shape_cast %157 : vector<1x32x1xf32> to vector<32x1xf32>
    %159 = vector.broadcast %158 : vector<32x1xf32> to vector<32x128xf32>
    %160 = arith.addf %156, %159 : vector<32x128xf32>
    %161 = math.tanh %160 : vector<32x128xf32>
    %c8_122 = arith.constant 8 : index
    %c0_123 = arith.constant 0 : index
    %c0_124 = arith.constant 0 : index
    %162 = vector.load %arg4[%c8_122, %c0_123, %c0_124] : memref<10x4x32xf32, #tpu.memory_space<vmem>>, vector<1x4x32xf32>
    %163 = vector.shape_cast %162 : vector<1x4x32xf32> to vector<4x32xf32>
    %cst_125 = arith.constant dense<0.000000e+00> : vector<4x128xf32>
    %164 = tpu.matmul %163, %161, %cst_125 {dimension_numbers = #tpu.dot_dimension_numbers<[1], [0], [0], [1], [0, 0, 1, 1], [], []>} : vector<4x32xf32>, vector<32x128xf32>, vector<4x128xf32> -> vector<4x128xf32>
    %c8_126 = arith.constant 8 : index
    %c0_127 = arith.constant 0 : index
    %c0_128 = arith.constant 0 : index
    %165 = vector.load %arg5[%c8_126, %c0_127, %c0_128] : memref<10x4x1xf32, #tpu.memory_space<vmem>>, vector<1x4x1xf32>
    %166 = vector.shape_cast %165 : vector<1x4x1xf32> to vector<4x1xf32>
    %167 = vector.broadcast %166 : vector<4x1xf32> to vector<4x128xf32>
    %168 = arith.addf %164, %167 : vector<4x128xf32>
    %c36 = arith.constant 36 : index
    %c0_129 = arith.constant 0 : index
    %169 = vector.load %arg1[%c36, %c0_129] : memref<44x128xf32, #tpu.memory_space<vmem>>, vector<4x128xf32>
    %170 = arith.subf %169, %150 : vector<4x128xf32>
    %171 = arith.mulf %168, %170 : vector<4x128xf32>
    %172 = arith.addf %153, %171 : vector<4x128xf32>
    %c9 = arith.constant 9 : index
    %c0_130 = arith.constant 0 : index
    %c0_131 = arith.constant 0 : index
    %173 = vector.load %arg2[%c9, %c0_130, %c0_131] : memref<10x32x4xf32, #tpu.memory_space<vmem>>, vector<1x32x4xf32>
    %174 = vector.shape_cast %173 : vector<1x32x4xf32> to vector<32x4xf32>
    %cst_132 = arith.constant dense<0.000000e+00> : vector<32x128xf32>
    %175 = tpu.matmul %174, %169, %cst_132 {dimension_numbers = #tpu.dot_dimension_numbers<[1], [0], [0], [1], [0, 0, 1, 1], [], []>} : vector<32x4xf32>, vector<4x128xf32>, vector<32x128xf32> -> vector<32x128xf32>
    %c9_133 = arith.constant 9 : index
    %c0_134 = arith.constant 0 : index
    %c0_135 = arith.constant 0 : index
    %176 = vector.load %arg3[%c9_133, %c0_134, %c0_135] : memref<10x32x1xf32, #tpu.memory_space<vmem>>, vector<1x32x1xf32>
    %177 = vector.shape_cast %176 : vector<1x32x1xf32> to vector<32x1xf32>
    %178 = vector.broadcast %177 : vector<32x1xf32> to vector<32x128xf32>
    %179 = arith.addf %175, %178 : vector<32x128xf32>
    %180 = math.tanh %179 : vector<32x128xf32>
    %c9_136 = arith.constant 9 : index
    %c0_137 = arith.constant 0 : index
    %c0_138 = arith.constant 0 : index
    %181 = vector.load %arg4[%c9_136, %c0_137, %c0_138] : memref<10x4x32xf32, #tpu.memory_space<vmem>>, vector<1x4x32xf32>
    %182 = vector.shape_cast %181 : vector<1x4x32xf32> to vector<4x32xf32>
    %cst_139 = arith.constant dense<0.000000e+00> : vector<4x128xf32>
    %183 = tpu.matmul %182, %180, %cst_139 {dimension_numbers = #tpu.dot_dimension_numbers<[1], [0], [0], [1], [0, 0, 1, 1], [], []>} : vector<4x32xf32>, vector<32x128xf32>, vector<4x128xf32> -> vector<4x128xf32>
    %c9_140 = arith.constant 9 : index
    %c0_141 = arith.constant 0 : index
    %c0_142 = arith.constant 0 : index
    %184 = vector.load %arg5[%c9_140, %c0_141, %c0_142] : memref<10x4x1xf32, #tpu.memory_space<vmem>>, vector<1x4x1xf32>
    %185 = vector.shape_cast %184 : vector<1x4x1xf32> to vector<4x1xf32>
    %186 = vector.broadcast %185 : vector<4x1xf32> to vector<4x128xf32>
    %187 = arith.addf %183, %186 : vector<4x128xf32>
    %c40 = arith.constant 40 : index
    %c0_143 = arith.constant 0 : index
    %188 = vector.load %arg1[%c40, %c0_143] : memref<44x128xf32, #tpu.memory_space<vmem>>, vector<4x128xf32>
    %189 = arith.subf %188, %169 : vector<4x128xf32>
    %190 = arith.mulf %187, %189 : vector<4x128xf32>
    %191 = arith.addf %172, %190 : vector<4x128xf32>
    %192 = tpu.concatenate %188, %191 in 0 : vector<4x128xf32>, vector<4x128xf32> -> vector<8x128xf32>
    %c0_144 = arith.constant 0 : index
    %c0_145 = arith.constant 0 : index
    %193 = vector.load %arg6[%c0_144, %c0_145] : memref<8x128xf32, #tpu.memory_space<vmem>>, vector<8x128xf32>
    tpu.vector_store %arg6[%c0_144, %c0_145], %192 {strides = array<i32>} : memref<8x128xf32, #tpu.memory_space<vmem>>, vector<8x128xf32>,
    return
  }
  func.func @transform_0(%arg0: i32) -> (i32, i32) {
    %c0_i32 = arith.constant 0 : i32
    %c0_i32_0 = arith.constant 0 : i32
    return %c0_i32, %arg0 : i32, i32
  }
  func.func @transform_1(%arg0: i32) -> (i32, i32, i32) {
    %c0_i32 = arith.constant 0 : i32
    %c0_i32_0 = arith.constant 0 : i32
    %c0_i32_1 = arith.constant 0 : i32
    %c0_i32_2 = arith.constant 0 : i32
    return %c0_i32, %c0_i32_0, %c0_i32_1 : i32, i32, i32
  }
  func.func @transform_2(%arg0: i32) -> (i32, i32, i32) {
    %c0_i32 = arith.constant 0 : i32
    %c0_i32_0 = arith.constant 0 : i32
    %c0_i32_1 = arith.constant 0 : i32
    %c0_i32_2 = arith.constant 0 : i32
    return %c0_i32, %c0_i32_0, %c0_i32_1 : i32, i32, i32
  }
  func.func @transform_3(%arg0: i32) -> (i32, i32, i32) {
    %c0_i32 = arith.constant 0 : i32
    %c0_i32_0 = arith.constant 0 : i32
    %c0_i32_1 = arith.constant 0 : i32
    %c0_i32_2 = arith.constant 0 : i32
    return %c0_i32, %c0_i32_0, %c0_i32_1 : i32, i32, i32
  }
  func.func @transform_4(%arg0: i32) -> (i32, i32, i32) {
    %c0_i32 = arith.constant 0 : i32
    %c0_i32_0 = arith.constant 0 : i32
    %c0_i32_1 = arith.constant 0 : i32
    %c0_i32_2 = arith.constant 0 : i32
    return %c0_i32, %c0_i32_0, %c0_i32_1 : i32, i32, i32
  }
  func.func @transform_5(%arg0: i32) -> (i32, i32) {
    %c0_i32 = arith.constant 0 : i32
    %c0_i32_0 = arith.constant 0 : i32
    return %c0_i32, %arg0 : i32, i32
  }
}

</mosaic_0001>

<llo_original>
// kernel: _lambda_.1
$region0: #{_lambda_.1}
  #allocation0 [shape = 'u32[]', space=smem, size = 0x4, offset = 0x4, fixed_abs, tag = 'smem constant byte address 0x4 - core index']
  #allocation1 [shape = 'u32[72,128]{1,0:T(1,128)}', space=vmem, size = 0x9000, scoped, tag = 'internal scratch']
  %s0 = inlined_call_operand.vmem [shape: f32[44,128], index: 0, kind: input, shape index: {}]
  %s1 = inlined_call_operand.vmem [shape: f32[10,32,4], index: 1, kind: input, shape index: {}]
  %s2 = inlined_call_operand.vmem [shape: f32[10,32,1], index: 2, kind: input, shape index: {}]
  %s3 = inlined_call_operand.vmem [shape: f32[10,4,32], index: 3, kind: input, shape index: {}]
  %s4 = inlined_call_operand.vmem [shape: f32[10,4,1], index: 4, kind: input, shape index: {}]
  %s5 = inlined_call_operand.vmem [shape: f32[8,128], index: 5, kind: output, shape index: {}]
  %s6 = sld [smem:[#allocation0]]
  $region30: #{_lambda_.1} parent=0
    _
  %s8 = ssub.s32 1, %s6
  %s9 = scalar_select 0, %s8, %s6
  // Predicated region
  $region2: #{_lambda_.1} parent=0 // pred_check
    _
  $region3: #{_lambda_.1} parent=0 // pred_check_branch
    %11 = sbr.rel (0) target = $region5
  $region4: #{_lambda_.1} parent=0 // pred_region
    _
  $region5: #{_lambda_.1} parent=0 // pred_fallthru
    _
  // Predicated region
  $region6: #{_lambda_.1} parent=0 // pred_check
    _
  $region7: #{_lambda_.1} parent=0 // pred_check_branch
    %13 = sbr.rel (0) target = $region9
  $region8: #{_lambda_.1} parent=0 // pred_region
    _
  $region9: #{_lambda_.1} parent=0 // pred_fallthru
    _
  // Predicated region
  $region10: #{_lambda_.1} parent=0 // pred_check
    _
  $region11: #{_lambda_.1} parent=0 // pred_check_branch
    %15 = sbr.rel (0) target = $region13
  $region12: #{_lambda_.1} parent=0 // pred_region
    _
  $region13: #{_lambda_.1} parent=0 // pred_fallthru
    _
  // Predicated region
  $region14: #{_lambda_.1} parent=0 // pred_check
    _
  $region15: #{_lambda_.1} parent=0 // pred_check_branch
    %17 = sbr.rel (0) target = $region17
  $region16: #{_lambda_.1} parent=0 // pred_region
    _
  $region17: #{_lambda_.1} parent=0 // pred_fallthru
    _
  // Predicated region
  $region18: #{_lambda_.1} parent=0 // pred_check
    _
  $region19: #{_lambda_.1} parent=0 // pred_check_branch
    %19 = sbr.rel (0) target = $region21
  $region20: #{_lambda_.1} parent=0 // pred_region
    _
  $region21: #{_lambda_.1} parent=0 // pred_fallthru
    _
  %v20 = vld [vmem:[%s0] sm:$0xf]
  %v21 = vld [vmem:[%s1] sm:$0xff]
  %v22 = vld [vmem:[%s1 + $0x8] sm:$0xff]
  %v23 = vld [vmem:[%s1 + $0x10] sm:$0xff]
  %v24 = vld [vmem:[%s1 + $0x18] sm:$0xff]
  %v25 = vld [vmem:[%s2] sm:$0xff]
  %v26 = vld [vmem:[%s2 + $0x8] sm:$0xff]
  %v27 = vld [vmem:[%s2 + $0x10] sm:$0xff]
  %v28 = vld [vmem:[%s2 + $0x18] sm:$0xff]
  %30 = vset.pattern.permute.xlu0 0
  %31 = vperm.xlu0 %30, %v25
  %v32 = vpop.permute.xlu0 %31
  %35 = vset.pattern.permute.xlu0 0
  %36 = vperm.xlu0 %35, %v26
  %v37 = vpop.permute.xlu0 %36
  %40 = vset.pattern.permute.xlu0 0
  %41 = vperm.xlu0 %40, %v27
  %v42 = vpop.permute.xlu0 %41
  %45 = vset.pattern.permute.xlu0 0
  %46 = vperm.xlu0 %45, %v28
  %v47 = vpop.permute.xlu0 %46
  %vm49 = vcmask 31744
  %v51 = vsel %vm49, %v21, 0
  %v54 = vsel %vm49, %v22, 0
  %v57 = vsel %vm49, %v23, 0
  %v60 = vsel %vm49, %v24, 0
  %vm62 = vcmask 1043456
  %v64 = vsel %vm62, %v20, 0
  %66 = vmatpush.msra.mxu0 0.0
  %67 = vmatpush.msra.mxu0 0.0
  %68 = vmatpush.msra.mxu0 0.0
  %69 = vmatpush.msra.mxu0 0.0
  %70 = vmatpush.msra.mxu0 0.0
  %71 = vmatpush.msra.mxu0 0.0
  %72 = vmatpush.msra.mxu0 0.0
  %73 = vmatpush.msra.mxu0 0.0
  %74 = vmatpush.msra.mxu0 0.0
  %75 = vmatpush.msra.mxu0 0.0
  %76 = vmatpush.msra.mxu0 0.0
  %77 = vmatpush.msra.mxu0 0.0
  %78 = vmatpush.msra.mxu0 0.0
  %79 = vmatpush.msra.mxu0 0.0
  %80 = vmatpush.msra.mxu0 0.0
  %81 = vmatpush.msra.mxu0 %v64
  %82 = vmatmul.f32.gmra.mxu0 %v51
  %v83 = vpop.f32.mrf.mxu0
  %v84 = vadd.f32 %v32, %v83
  %85 = vmatmul.f32.gmra.mxu0 %v54
  %v86 = vpop.f32.mrf.mxu0
  %v87 = vadd.f32 %v37, %v86
  %88 = vmatmul.f32.gmra.mxu0 %v57
  %v89 = vpop.f32.mrf.mxu0
  %v90 = vadd.f32 %v42, %v89
  %91 = vmatmul.f32.gmra.mxu0 %v60
  %v92 = vpop.f32.mrf.mxu0
  %v93 = vadd.f32 %v47, %v92
  %94 = vdwg.mxu0
  %v95 = vtanh.pop %v84
  %v96 = vtanh.pop %v87
  %v97 = vtanh.pop %v90
  %v98 = vtanh.pop %v93
  %v99 = vld [vmem:[%s3] sm:$0xf]
  %v100 = vld [vmem:[%s4] sm:$0xf]
  %102 = vset.pattern.permute.xlu0 0
  %103 = vperm.xlu0 %102, %v100
  %v104 = vpop.permute.xlu0 %103
  %vm106 = vcmask 261120
  %v108 = vsel %vm106, %v99, 0
  %110 = vmatpush.msra.mxu0 0.0
  %111 = vmatpush.msra.mxu0 0.0
  %112 = vmatpush.msra.mxu0 0.0
  %113 = vmatpush.msra.mxu0 0.0
  %114 = vmatpush.msra.mxu0 0.0
  %115 = vmatpush.msra.mxu0 0.0
  %116 = vmatpush.msra.mxu0 0.0
  %117 = vmatpush.msra.mxu0 0.0
  %118 = vmatpush.msra.mxu0 0.0
  %119 = vmatpush.msra.mxu0 0.0
  %120 = vmatpush.msra.mxu0 0.0
  %121 = vmatpush.msra.mxu0 0.0
  %122 = vmatpush.msra.mxu0 %v98
  %123 = vmatpush.msra.mxu0 %v97
  %124 = vmatpush.msra.mxu0 %v96
  %125 = vmatpush.msra.mxu0 %v95
  %126 = vmatmul.f32.gmra.mxu0 %v108
  %v127 = vpop.f32.mrf.mxu0
  %v128 = vadd.f32 %v104, %v127
  %129 = vdwg.mxu0
  %v130 = vld [vmem:[%s0 + $0x4] sm:$0xf]
  %v131 = vsub.f32 %v130, %v20
  %v132 = vmul.f32 %v128, %v131
  %v133 = vadd.f32 %v132, 0.0
  %s134 = scalar_lea.vmem %s1, 32
  %v135 = vld [vmem:[%s134] sm:$0xff]
  %v136 = vld [vmem:[%s134 + $0x8] sm:$0xff]
  %v137 = vld [vmem:[%s134 + $0x10] sm:$0xff]
  %v138 = vld [vmem:[%s134 + $0x18] sm:$0xff]
  %s139 = scalar_lea.vmem %s2, 32
  %v140 = vld [vmem:[%s139] sm:$0xff]
  %v141 = vld [vmem:[%s139 + $0x8] sm:$0xff]
  %v142 = vld [vmem:[%s139 + $0x10] sm:$0xff]
  %v143 = vld [vmem:[%s139 + $0x18] sm:$0xff]
  %145 = vset.pattern.permute.xlu0 0
  %146 = vperm.xlu0 %145, %v140
  %v147 = vpop.permute.xlu0 %146
  %150 = vset.pattern.permute.xlu0 0
  %151 = vperm.xlu0 %150, %v141
  %v152 = vpop.permute.xlu0 %151
  %155 = vset.pattern.permute.xlu0 0
  %156 = vperm.xlu0 %155, %v142
  %v157 = vpop.permute.xlu0 %156
  %160 = vset.pattern.permute.xlu0 0
  %161 = vperm.xlu0 %160, %v143
  %v162 = vpop.permute.xlu0 %161
  %v165 = vsel %vm49, %v135, 0
  %v168 = vsel %vm49, %v136, 0
  %v171 = vsel %vm49, %v137, 0
  %v174 = vsel %vm49, %v138, 0
  %v177 = vsel %vm62, %v130, 0
  %179 = vmatpush.msra.mxu0 0.0
  %180 = vmatpush.msra.mxu0 0.0
  %181 = vmatpush.msra.mxu0 0.0
  %182 = vmatpush.msra.mxu0 0.0
  %183 = vmatpush.msra.mxu0 0.0
  %184 = vmatpush.msra.mxu0 0.0
  %185 = vmatpush.msra.mxu0 0.0
  %186 = vmatpush.msra.mxu0 0.0
  %187 = vmatpush.msra.mxu0 0.0
  %188 = vmatpush.msra.mxu0 0.0
  %189 = vmatpush.msra.mxu0 0.0
  %190 = vmatpush.msra.mxu0 0.0
  %191 = vmatpush.msra.mxu0 0.0
  %192 = vmatpush.msra.mxu0 0.0
  %193 = vmatpush.msra.mxu0 0.0
  %194 = vmatpush.msra.mxu0 %v177
  %195 = vmatmul.f32.gmra.mxu0 %v165
  %v196 = vpop.f32.mrf.mxu0
  %v197 = vadd.f32 %v147, %v196
  %198 = vmatmul.f32.gmra.mxu0 %v168
  %v199 = vpop.f32.mrf.mxu0
  %v200 = vadd.f32 %v152, %v199
  %201 = vmatmul.f32.gmra.mxu0 %v171
  %v202 = vpop.f32.mrf.mxu0
  %v203 = vadd.f32 %v157, %v202
  %204 = vmatmul.f32.gmra.mxu0 %v174
  %v205 = vpop.f32.mrf.mxu0
  %v206 = vadd.f32 %v162, %v205
  %207 = vdwg.mxu0
  %v208 = vtanh.pop %v197
  %v209 = vtanh.pop %v200
  %v210 = vtanh.pop %v203
  %v211 = vtanh.pop %v206
  %s212 = scalar_lea.vmem %s3, 4
  %v213 = vld [vmem:[%s212] sm:$0xf]
  %s214 = scalar_lea.vmem %s4, 4
  %v215 = vld [vmem:[%s214] sm:$0xf]
  %217 = vset.pattern.permute.xlu0 0
  %218 = vperm.xlu0 %217, %v215
  %v219 = vpop.permute.xlu0 %218
  %v222 = vsel %vm106, %v213, 0
  %224 = vmatpush.msra.mxu0 0.0
  %225 = vmatpush.msra.mxu0 0.0
  %226 = vmatpush.msra.mxu0 0.0
  %227 = vmatpush.msra.mxu0 0.0
  %228 = vmatpush.msra.mxu0 0.0
  %229 = vmatpush.msra.mxu0 0.0
  %230 = vmatpush.msra.mxu0 0.0
  %231 = vmatpush.msra.mxu0 0.0
  %232 = vmatpush.msra.mxu0 0.0
  %233 = vmatpush.msra.mxu0 0.0
  %234 = vmatpush.msra.mxu0 0.0
  %235 = vmatpush.msra.mxu0 0.0
  %236 = vmatpush.msra.mxu0 %v211
  %237 = vmatpush.msra.mxu0 %v210
  %238 = vmatpush.msra.mxu0 %v209
  %239 = vmatpush.msra.mxu0 %v208
  %240 = vmatmul.f32.gmra.mxu0 %v222
  %v241 = vpop.f32.mrf.mxu0
  %v242 = vadd.f32 %v219, %v241
  %243 = vdwg.mxu0
  %v244 = vld [vmem:[%s0 + $0x8] sm:$0xf]
  %v245 = vsub.f32 %v244, %v130
  %v246 = vmul.f32 %v242, %v245
  %v247 = vadd.f32 %v133, %v246
  %s248 = scalar_lea.vmem %s1, 64
  %v249 = vld [vmem:[%s248] sm:$0xff]
  %v250 = vld [vmem:[%s248 + $0x8] sm:$0xff]
  %v251 = vld [vmem:[%s248 + $0x10] sm:$0xff]
  %v252 = vld [vmem:[%s248 + $0x18] sm:$0xff]
  %s253 = scalar_lea.vmem %s2, 64
  %v254 = vld [vmem:[%s253] sm:$0xff]
  %v255 = vld [vmem:[%s253 + $0x8] sm:$0xff]
  %v256 = vld [vmem:[%s253 + $0x10] sm:$0xff]
  %v257 = vld [vmem:[%s253 + $0x18] sm:$0xff]
  %259 = vset.pattern.permute.xlu0 0
  %260 = vperm.xlu0 %259, %v254
  %v261 = vpop.permute.xlu0 %260
  %264 = vset.pattern.permute.xlu0 0
  %265 = vperm.xlu0 %264, %v255
  %v266 = vpop.permute.xlu0 %265
  %269 = vset.pattern.permute.xlu0 0
  %270 = vperm.xlu0 %269, %v256
  %v271 = vpop.permute.xlu0 %270
  %274 = vset.pattern.permute.xlu0 0
  %275 = vperm.xlu0 %274, %v257
  %v276 = vpop.permute.xlu0 %275
  %v279 = vsel %vm49, %v249, 0
  %v282 = vsel %vm49, %v250, 0
  %v285 = vsel %vm49, %v251, 0
  %v288 = vsel %vm49, %v252, 0
  %v291 = vsel %vm62, %v244, 0
  %293 = vmatpush.msra.mxu0 0.0
  %294 = vmatpush.msra.mxu0 0.0
  %295 = vmatpush.msra.mxu0 0.0
  %296 = vmatpush.msra.mxu0 0.0
  %297 = vmatpush.msra.mxu0 0.0
  %298 = vmatpush.msra.mxu0 0.0
  %299 = vmatpush.msra.mxu0 0.0
  %300 = vmatpush.msra.mxu0 0.0
  %301 = vmatpush.msra.mxu0 0.0
  %302 = vmatpush.msra.mxu0 0.0
  %303 = vmatpush.msra.mxu0 0.0
  %304 = vmatpush.msra.mxu0 0.0
  %305 = vmatpush.msra.mxu0 0.0
  %306 = vmatpush.msra.mxu0 0.0
  %307 = vmatpush.msra.mxu0 0.0
  %308 = vmatpush.msra.mxu0 %v291
  %309 = vmatmul.f32.gmra.mxu0 %v279
  %v310 = vpop.f32.mrf.mxu0
  %v311 = vadd.f32 %v261, %v310
  %312 = vmatmul.f32.gmra.mxu0 %v282
  %v313 = vpop.f32.mrf.mxu0
  %v314 = vadd.f32 %v266, %v313
  %315 = vmatmul.f32.gmra.mxu0 %v285
  %v316 = vpop.f32.mrf.mxu0
  %v317 = vadd.f32 %v271, %v316
  %318 = vmatmul.f32.gmra.mxu0 %v288
  %v319 = vpop.f32.mrf.mxu0
  %v320 = vadd.f32 %v276, %v319
  %321 = vdwg.mxu0
  %v322 = vtanh.pop %v311
  %v323 = vtanh.pop %v314
  %v324 = vtanh.pop %v317
  %v325 = vtanh.pop %v320
  %s326 = scalar_lea.vmem %s3, 8
  %v327 = vld [vmem:[%s326] sm:$0xf]
  %s328 = scalar_lea.vmem %s4, 8
  %v329 = vld [vmem:[%s328] sm:$0xf]
  %331 = vset.pattern.permute.xlu0 0
  %332 = vperm.xlu0 %331, %v329
  %v333 = vpop.permute.xlu0 %332
  %v336 = vsel %vm106, %v327, 0
  %338 = vmatpush.msra.mxu0 0.0
  %339 = vmatpush.msra.mxu0 0.0
  %340 = vmatpush.msra.mxu0 0.0
  %341 = vmatpush.msra.mxu0 0.0
  %342 = vmatpush.msra.mxu0 0.0
  %343 = vmatpush.msra.mxu0 0.0
  %344 = vmatpush.msra.mxu0 0.0
  %345 = vmatpush.msra.mxu0 0.0
  %346 = vmatpush.msra.mxu0 0.0
  %347 = vmatpush.msra.mxu0 0.0
  %348 = vmatpush.msra.mxu0 0.0
  %349 = vmatpush.msra.mxu0 0.0
  %350 = vmatpush.msra.mxu0 %v325
  %351 = vmatpush.msra.mxu0 %v324
  %352 = vmatpush.msra.mxu0 %v323
  %353 = vmatpush.msra.mxu0 %v322
  %354 = vmatmul.f32.gmra.mxu0 %v336
  %v355 = vpop.f32.mrf.mxu0
  %v356 = vadd.f32 %v333, %v355
  %357 = vdwg.mxu0
  %v358 = vld [vmem:[%s0 + $0xc] sm:$0xf]
  %v359 = vsub.f32 %v358, %v244
  %v360 = vmul.f32 %v356, %v359
  %v361 = vadd.f32 %v247, %v360
  %s362 = scalar_lea.vmem %s1, 96
  %v363 = vld [vmem:[%s362] sm:$0xff]
  %v364 = vld [vmem:[%s362 + $0x8] sm:$0xff]
  %v365 = vld [vmem:[%s362 + $0x10] sm:$0xff]
  %v366 = vld [vmem:[%s362 + $0x18] sm:$0xff]
  %s367 = scalar_lea.vmem %s2, 96
  %v368 = vld [vmem:[%s367] sm:$0xff]
  %v369 = vld [vmem:[%s367 + $0x8] sm:$0xff]
  %v370 = vld [vmem:[%s367 + $0x10] sm:$0xff]
  %v371 = vld [vmem:[%s367 + $0x18] sm:$0xff]
  %373 = vset.pattern.permute.xlu0 0
  %374 = vperm.xlu0 %373, %v368
  %v375 = vpop.permute.xlu0 %374
  %378 = vset.pattern.permute.xlu0 0
  %379 = vperm.xlu0 %378, %v369
  %v380 = vpop.permute.xlu0 %379
  %383 = vset.pattern.permute.xlu0 0
  %384 = vperm.xlu0 %383, %v370
  %v385 = vpop.permute.xlu0 %384
  %388 = vset.pattern.permute.xlu0 0
  %389 = vperm.xlu0 %388, %v371
  %v390 = vpop.permute.xlu0 %389
  %v393 = vsel %vm49, %v363, 0
  %v396 = vsel %vm49, %v364, 0
  %v399 = vsel %vm49, %v365, 0
  %v402 = vsel %vm49, %v366, 0
  %v405 = vsel %vm62, %v358, 0
  %407 = vmatpush.msra.mxu0 0.0
  %408 = vmatpush.msra.mxu0 0.0
  %409 = vmatpush.msra.mxu0 0.0
  %410 = vmatpush.msra.mxu0 0.0
  %411 = vmatpush.msra.mxu0 0.0
  %412 = vmatpush.msra.mxu0 0.0
  %413 = vmatpush.msra.mxu0 0.0
  %414 = vmatpush.msra.mxu0 0.0
  %415 = vmatpush.msra.mxu0 0.0
  %416 = vmatpush.msra.mxu0 0.0
  %417 = vmatpush.msra.mxu0 0.0
  %418 = vmatpush.msra.mxu0 0.0
  %419 = vmatpush.msra.mxu0 0.0
  %420 = vmatpush.msra.mxu0 0.0
  %421 = vmatpush.msra.mxu0 0.0
  %422 = vmatpush.msra.mxu0 %v405
  %423 = vmatmul.f32.gmra.mxu0 %v393
  %v424 = vpop.f32.mrf.mxu0
  %v425 = vadd.f32 %v375, %v424
  %426 = vmatmul.f32.gmra.mxu0 %v396
  %v427 = vpop.f32.mrf.mxu0
  %v428 = vadd.f32 %v380, %v427
  %429 = vmatmul.f32.gmra.mxu0 %v399
  %v430 = vpop.f32.mrf.mxu0
  %v431 = vadd.f32 %v385, %v430
  %432 = vmatmul.f32.gmra.mxu0 %v402
  %v433 = vpop.f32.mrf.mxu0
  %v434 = vadd.f32 %v390, %v433
  %435 = vdwg.mxu0
  %v436 = vtanh.pop %v425
  %v437 = vtanh.pop %v428
  %v438 = vtanh.pop %v431
  %v439 = vtanh.pop %v434
  %s440 = scalar_lea.vmem %s3, 12
  %v441 = vld [vmem:[%s440] sm:$0xf]
  %s442 = scalar_lea.vmem %s4, 12
  %v443 = vld [vmem:[%s442] sm:$0xf]
  %445 = vset.pattern.permute.xlu0 0
  %446 = vperm.xlu0 %445, %v443
  %v447 = vpop.permute.xlu0 %446
  %v450 = vsel %vm106, %v441, 0
  %452 = vmatpush.msra.mxu0 0.0
  %453 = vmatpush.msra.mxu0 0.0
  %454 = vmatpush.msra.mxu0 0.0
  %455 = vmatpush.msra.mxu0 0.0
  %456 = vmatpush.msra.mxu0 0.0
  %457 = vmatpush.msra.mxu0 0.0
  %458 = vmatpush.msra.mxu0 0.0
  %459 = vmatpush.msra.mxu0 0.0
  %460 = vmatpush.msra.mxu0 0.0
  %461 = vmatpush.msra.mxu0 0.0
  %462 = vmatpush.msra.mxu0 0.0
  %463 = vmatpush.msra.mxu0 0.0
  %464 = vmatpush.msra.mxu0 %v439
  %465 = vmatpush.msra.mxu0 %v438
  %466 = vmatpush.msra.mxu0 %v437
  %467 = vmatpush.msra.mxu0 %v436
  %468 = vmatmul.f32.gmra.mxu0 %v450
  %v469 = vpop.f32.mrf.mxu0
  %v470 = vadd.f32 %v447, %v469
  %471 = vdwg.mxu0
  %v472 = vld [vmem:[%s0 + $0x10] sm:$0xf]
  %v473 = vsub.f32 %v472, %v358
  %v474 = vmul.f32 %v470, %v473
  %v475 = vadd.f32 %v361, %v474
  %s476 = scalar_lea.vmem %s1, 128
  %v477 = vld [vmem:[%s476] sm:$0xff]
  %v478 = vld [vmem:[%s476 + $0x8] sm:$0xff]
  %v479 = vld [vmem:[%s476 + $0x10] sm:$0xff]
  %v480 = vld [vmem:[%s476 + $0x18] sm:$0xff]
  %s481 = scalar_lea.vmem %s2, 128
  %v482 = vld [vmem:[%s481] sm:$0xff]
  %v483 = vld [vmem:[%s481 + $0x8] sm:$0xff]
  %v484 = vld [vmem:[%s481 + $0x10] sm:$0xff]
  %v485 = vld [vmem:[%s481 + $0x18] sm:$0xff]
  %487 = vset.pattern.permute.xlu0 0
  %488 = vperm.xlu0 %487, %v482
  %v489 = vpop.permute.xlu0 %488
  %492 = vset.pattern.permute.xlu0 0
  %493 = vperm.xlu0 %492, %v483
  %v494 = vpop.permute.xlu0 %493
  %497 = vset.pattern.permute.xlu0 0
  %498 = vperm.xlu0 %497, %v484
  %v499 = vpop.permute.xlu0 %498
  %502 = vset.pattern.permute.xlu0 0
  %503 = vperm.xlu0 %502, %v485
  %v504 = vpop.permute.xlu0 %503
  %v507 = vsel %vm49, %v477, 0
  %v510 = vsel %vm49, %v478, 0
  %v513 = vsel %vm49, %v479, 0
  %v516 = vsel %vm49, %v480, 0
  %v519 = vsel %vm62, %v472, 0
  %521 = vmatpush.msra.mxu0 0.0
  %522 = vmatpush.msra.mxu0 0.0
  %523 = vmatpush.msra.mxu0 0.0
  %524 = vmatpush.msra.mxu0 0.0
  %525 = vmatpush.msra.mxu0 0.0
  %526 = vmatpush.msra.mxu0 0.0
  %527 = vmatpush.msra.mxu0 0.0
  %528 = vmatpush.msra.mxu0 0.0
  %529 = vmatpush.msra.mxu0 0.0
  %530 = vmatpush.msra.mxu0 0.0
  %531 = vmatpush.msra.mxu0 0.0
  %532 = vmatpush.msra.mxu0 0.0
  %533 = vmatpush.msra.mxu0 0.0
  %534 = vmatpush.msra.mxu0 0.0
  %535 = vmatpush.msra.mxu0 0.0
  %536 = vmatpush.msra.mxu0 %v519
  %537 = vmatmul.f32.gmra.mxu0 %v507
  %v538 = vpop.f32.mrf.mxu0
  %v539 = vadd.f32 %v489, %v538
  %540 = vmatmul.f32.gmra.mxu0 %v510
  %v541 = vpop.f32.mrf.mxu0
  %v542 = vadd.f32 %v494, %v541
  %543 = vmatmul.f32.gmra.mxu0 %v513
  %v544 = vpop.f32.mrf.mxu0
  %v545 = vadd.f32 %v499, %v544
  %546 = vmatmul.f32.gmra.mxu0 %v516
  %v547 = vpop.f32.mrf.mxu0
  %v548 = vadd.f32 %v504, %v547
  %549 = vdwg.mxu0
  %v550 = vtanh.pop %v539
  %v551 = vtanh.pop %v542
  %v552 = vtanh.pop %v545
  %v553 = vtanh.pop %v548
  %s554 = scalar_lea.vmem %s3, 16
  %v555 = vld [vmem:[%s554] sm:$0xf]
  %s556 = scalar_lea.vmem %s4, 16
  %v557 = vld [vmem:[%s556] sm:$0xf]
  %559 = vset.pattern.permute.xlu0 0
  %560 = vperm.xlu0 %559, %v557
  %v561 = vpop.permute.xlu0 %560
  %v564 = vsel %vm106, %v555, 0
  %566 = vmatpush.msra.mxu0 0.0
  %567 = vmatpush.msra.mxu0 0.0
  %568 = vmatpush.msra.mxu0 0.0
  %569 = vmatpush.msra.mxu0 0.0
  %570 = vmatpush.msra.mxu0 0.0
  %571 = vmatpush.msra.mxu0 0.0
  %572 = vmatpush.msra.mxu0 0.0
  %573 = vmatpush.msra.mxu0 0.0
  %574 = vmatpush.msra.mxu0 0.0
  %575 = vmatpush.msra.mxu0 0.0
  %576 = vmatpush.msra.mxu0 0.0
  %577 = vmatpush.msra.mxu0 0.0
  %578 = vmatpush.msra.mxu0 %v553
  %579 = vmatpush.msra.mxu0 %v552
  %580 = vmatpush.msra.mxu0 %v551
  %581 = vmatpush.msra.mxu0 %v550
  %582 = vmatmul.f32.gmra.mxu0 %v564
  %v583 = vpop.f32.mrf.mxu0
  %v584 = vadd.f32 %v561, %v583
  %585 = vdwg.mxu0
  %v586 = vld [vmem:[%s0 + $0x14] sm:$0xf]
  %v587 = vsub.f32 %v586, %v472
  %v588 = vmul.f32 %v584, %v587
  %v589 = vadd.f32 %v475, %v588
  %s590 = scalar_lea.vmem %s1, 160
  %v591 = vld [vmem:[%s590] sm:$0xff]
  %v592 = vld [vmem:[%s590 + $0x8] sm:$0xff]
  %v593 = vld [vmem:[%s590 + $0x10] sm:$0xff]
  %v594 = vld [vmem:[%s590 + $0x18] sm:$0xff]
  %s595 = scalar_lea.vmem %s2, 160
  %v596 = vld [vmem:[%s595] sm:$0xff]
  %v597 = vld [vmem:[%s595 + $0x8] sm:$0xff]
  %v598 = vld [vmem:[%s595 + $0x10] sm:$0xff]
  %v599 = vld [vmem:[%s595 + $0x18] sm:$0xff]
  %601 = vset.pattern.permute.xlu0 0
  %602 = vperm.xlu0 %601, %v596
  %v603 = vpop.permute.xlu0 %602
  %606 = vset.pattern.permute.xlu0 0
  %607 = vperm.xlu0 %606, %v597
  %v608 = vpop.permute.xlu0 %607
  %611 = vset.pattern.permute.xlu0 0
  %612 = vperm.xlu0 %611, %v598
  %v613 = vpop.permute.xlu0 %612
  %616 = vset.pattern.permute.xlu0 0
  %617 = vperm.xlu0 %616, %v599
  %v618 = vpop.permute.xlu0 %617
  %v621 = vsel %vm49, %v591, 0
  %v624 = vsel %vm49, %v592, 0
  %v627 = vsel %vm49, %v593, 0
  %v630 = vsel %vm49, %v594, 0
  %v633 = vsel %vm62, %v586, 0
  %635 = vmatpush.msra.mxu0 0.0
  %636 = vmatpush.msra.mxu0 0.0
  %637 = vmatpush.msra.mxu0 0.0
  %638 = vmatpush.msra.mxu0 0.0
  %639 = vmatpush.msra.mxu0 0.0
  %640 = vmatpush.msra.mxu0 0.0
  %641 = vmatpush.msra.mxu0 0.0
  %642 = vmatpush.msra.mxu0 0.0
  %643 = vmatpush.msra.mxu0 0.0
  %644 = vmatpush.msra.mxu0 0.0
  %645 = vmatpush.msra.mxu0 0.0
  %646 = vmatpush.msra.mxu0 0.0
  %647 = vmatpush.msra.mxu0 0.0
  %648 = vmatpush.msra.mxu0 0.0
  %649 = vmatpush.msra.mxu0 0.0
  %650 = vmatpush.msra.mxu0 %v633
  %651 = vmatmul.f32.gmra.mxu0 %v621
  %v652 = vpop.f32.mrf.mxu0
  %v653 = vadd.f32 %v603, %v652
  %654 = vmatmul.f32.gmra.mxu0 %v624
  %v655 = vpop.f32.mrf.mxu0
  %v656 = vadd.f32 %v608, %v655
  %657 = vmatmul.f32.gmra.mxu0 %v627
  %v658 = vpop.f32.mrf.mxu0
  %v659 = vadd.f32 %v613, %v658
  %660 = vmatmul.f32.gmra.mxu0 %v630
  %v661 = vpop.f32.mrf.mxu0
  %v662 = vadd.f32 %v618, %v661
  %663 = vdwg.mxu0
  %v664 = vtanh.pop %v653
  %v665 = vtanh.pop %v656
  %v666 = vtanh.pop %v659
  %v667 = vtanh.pop %v662
  %s668 = scalar_lea.vmem %s3, 20
  %v669 = vld [vmem:[%s668] sm:$0xf]
  %s670 = scalar_lea.vmem %s4, 20
  %v671 = vld [vmem:[%s670] sm:$0xf]
  %673 = vset.pattern.permute.xlu0 0
  %674 = vperm.xlu0 %673, %v671
  %v675 = vpop.permute.xlu0 %674
  %v678 = vsel %vm106, %v669, 0
  %680 = vmatpush.msra.mxu0 0.0
  %681 = vmatpush.msra.mxu0 0.0
  %682 = vmatpush.msra.mxu0 0.0
  %683 = vmatpush.msra.mxu0 0.0
  %684 = vmatpush.msra.mxu0 0.0
  %685 = vmatpush.msra.mxu0 0.0
  %686 = vmatpush.msra.mxu0 0.0
  %687 = vmatpush.msra.mxu0 0.0
  %688 = vmatpush.msra.mxu0 0.0
  %689 = vmatpush.msra.mxu0 0.0
  %690 = vmatpush.msra.mxu0 0.0
  %691 = vmatpush.msra.mxu0 0.0
  %692 = vmatpush.msra.mxu0 %v667
  %693 = vmatpush.msra.mxu0 %v666
  %694 = vmatpush.msra.mxu0 %v665
  %695 = vmatpush.msra.mxu0 %v664
  %696 = vmatmul.f32.gmra.mxu0 %v678
  %v697 = vpop.f32.mrf.mxu0
  %v698 = vadd.f32 %v675, %v697
  %699 = vdwg.mxu0
  %v700 = vld [vmem:[%s0 + $0x18] sm:$0xf]
  %v701 = vsub.f32 %v700, %v586
  %v702 = vmul.f32 %v698, %v701
  %v703 = vadd.f32 %v589, %v702
  %s704 = scalar_lea.vmem %s1, 192
  %v705 = vld [vmem:[%s704] sm:$0xff]
  %v706 = vld [vmem:[%s704 + $0x8] sm:$0xff]
  %v707 = vld [vmem:[%s704 + $0x10] sm:$0xff]
  %v708 = vld [vmem:[%s704 + $0x18] sm:$0xff]
  %s709 = scalar_lea.vmem %s2, 192
  %v710 = vld [vmem:[%s709] sm:$0xff]
  %v711 = vld [vmem:[%s709 + $0x8] sm:$0xff]
  %v712 = vld [vmem:[%s709 + $0x10] sm:$0xff]
  %v713 = vld [vmem:[%s709 + $0x18] sm:$0xff]
  %715 = vset.pattern.permute.xlu0 0
  %716 = vperm.xlu0 %715, %v710
  %v717 = vpop.permute.xlu0 %716
  %720 = vset.pattern.permute.xlu0 0
  %721 = vperm.xlu0 %720, %v711
  %v722 = vpop.permute.xlu0 %721
  %725 = vset.pattern.permute.xlu0 0
  %726 = vperm.xlu0 %725, %v712
  %v727 = vpop.permute.xlu0 %726
  %730 = vset.pattern.permute.xlu0 0
  %731 = vperm.xlu0 %730, %v713
  %v732 = vpop.permute.xlu0 %731
  %v735 = vsel %vm49, %v705, 0
  %v738 = vsel %vm49, %v706, 0
  %v741 = vsel %vm49, %v707, 0
  %v744 = vsel %vm49, %v708, 0
  %v747 = vsel %vm62, %v700, 0
  %749 = vmatpush.msra.mxu0 0.0
  %750 = vmatpush.msra.mxu0 0.0
  %751 = vmatpush.msra.mxu0 0.0
  %752 = vmatpush.msra.mxu0 0.0
  %753 = vmatpush.msra.mxu0 0.0
  %754 = vmatpush.msra.mxu0 0.0
  %755 = vmatpush.msra.mxu0 0.0
  %756 = vmatpush.msra.mxu0 0.0
  %757 = vmatpush.msra.mxu0 0.0
  %758 = vmatpush.msra.mxu0 0.0
  %759 = vmatpush.msra.mxu0 0.0
  %760 = vmatpush.msra.mxu0 0.0
  %761 = vmatpush.msra.mxu0 0.0
  %762 = vmatpush.msra.mxu0 0.0
  %763 = vmatpush.msra.mxu0 0.0
  %764 = vmatpush.msra.mxu0 %v747
  %765 = vmatmul.f32.gmra.mxu0 %v735
  %v766 = vpop.f32.mrf.mxu0
  %v767 = vadd.f32 %v717, %v766
  %768 = vmatmul.f32.gmra.mxu0 %v738
  %v769 = vpop.f32.mrf.mxu0
  %v770 = vadd.f32 %v722, %v769
  %771 = vmatmul.f32.gmra.mxu0 %v741
  %v772 = vpop.f32.mrf.mxu0
  %v773 = vadd.f32 %v727, %v772
  %774 = vmatmul.f32.gmra.mxu0 %v744
  %v775 = vpop.f32.mrf.mxu0
  %v776 = vadd.f32 %v732, %v775
  %777 = vdwg.mxu0
  %v778 = vtanh.pop %v767
  %v779 = vtanh.pop %v770
  %v780 = vtanh.pop %v773
  %v781 = vtanh.pop %v776
  %s782 = scalar_lea.vmem %s3, 24
  %v783 = vld [vmem:[%s782] sm:$0xf]
  %s784 = scalar_lea.vmem %s4, 24
  %v785 = vld [vmem:[%s784] sm:$0xf]
  %787 = vset.pattern.permute.xlu0 0
  %788 = vperm.xlu0 %787, %v785
  %v789 = vpop.permute.xlu0 %788
  %v792 = vsel %vm106, %v783, 0
  %794 = vmatpush.msra.mxu0 0.0
  %795 = vmatpush.msra.mxu0 0.0
  %796 = vmatpush.msra.mxu0 0.0
  %797 = vmatpush.msra.mxu0 0.0
  %798 = vmatpush.msra.mxu0 0.0
  %799 = vmatpush.msra.mxu0 0.0
  %800 = vmatpush.msra.mxu0 0.0
  %801 = vmatpush.msra.mxu0 0.0
  %802 = vmatpush.msra.mxu0 0.0
  %803 = vmatpush.msra.mxu0 0.0
  %804 = vmatpush.msra.mxu0 0.0
  %805 = vmatpush.msra.mxu0 0.0
  %806 = vmatpush.msra.mxu0 %v781
  %807 = vmatpush.msra.mxu0 %v780
  %808 = vmatpush.msra.mxu0 %v779
  %809 = vmatpush.msra.mxu0 %v778
  %810 = vmatmul.f32.gmra.mxu0 %v792
  %v811 = vpop.f32.mrf.mxu0
  %v812 = vadd.f32 %v789, %v811
  %813 = vdwg.mxu0
  %v814 = vld [vmem:[%s0 + $0x1c] sm:$0xf]
  %v815 = vsub.f32 %v814, %v700
  %v816 = vmul.f32 %v812, %v815
  %v817 = vadd.f32 %v703, %v816
  %s818 = scalar_lea.vmem %s1, 224
  %v819 = vld [vmem:[%s818] sm:$0xff]
  %v820 = vld [vmem:[%s818 + $0x8] sm:$0xff]
  %v821 = vld [vmem:[%s818 + $0x10] sm:$0xff]
  %v822 = vld [vmem:[%s818 + $0x18] sm:$0xff]
  %s823 = scalar_lea.vmem %s2, 224
  %v824 = vld [vmem:[%s823] sm:$0xff]
  %v825 = vld [vmem:[%s823 + $0x8] sm:$0xff]
  %v826 = vld [vmem:[%s823 + $0x10] sm:$0xff]
  %v827 = vld [vmem:[%s823 + $0x18] sm:$0xff]
  %829 = vset.pattern.permute.xlu0 0
  %830 = vperm.xlu0 %829, %v824
  %v831 = vpop.permute.xlu0 %830
  %834 = vset.pattern.permute.xlu0 0
  %835 = vperm.xlu0 %834, %v825
  %v836 = vpop.permute.xlu0 %835
  %839 = vset.pattern.permute.xlu0 0
  %840 = vperm.xlu0 %839, %v826
  %v841 = vpop.permute.xlu0 %840
  %844 = vset.pattern.permute.xlu0 0
  %845 = vperm.xlu0 %844, %v827
  %v846 = vpop.permute.xlu0 %845
  %v849 = vsel %vm49, %v819, 0
  %v852 = vsel %vm49, %v820, 0
  %v855 = vsel %vm49, %v821, 0
  %v858 = vsel %vm49, %v822, 0
  %v861 = vsel %vm62, %v814, 0
  %863 = vmatpush.msra.mxu0 0.0
  %864 = vmatpush.msra.mxu0 0.0
  %865 = vmatpush.msra.mxu0 0.0
  %866 = vmatpush.msra.mxu0 0.0
  %867 = vmatpush.msra.mxu0 0.0
  %868 = vmatpush.msra.mxu0 0.0
  %869 = vmatpush.msra.mxu0 0.0
  %870 = vmatpush.msra.mxu0 0.0
  %871 = vmatpush.msra.mxu0 0.0
  %872 = vmatpush.msra.mxu0 0.0
  %873 = vmatpush.msra.mxu0 0.0
  %874 = vmatpush.msra.mxu0 0.0
  %875 = vmatpush.msra.mxu0 0.0
  %876 = vmatpush.msra.mxu0 0.0
  %877 = vmatpush.msra.mxu0 0.0
  %878 = vmatpush.msra.mxu0 %v861
  %879 = vmatmul.f32.gmra.mxu0 %v849
  %v880 = vpop.f32.mrf.mxu0
  %v881 = vadd.f32 %v831, %v880
  %882 = vmatmul.f32.gmra.mxu0 %v852
  %v883 = vpop.f32.mrf.mxu0
  %v884 = vadd.f32 %v836, %v883
  %885 = vmatmul.f32.gmra.mxu0 %v855
  %v886 = vpop.f32.mrf.mxu0
  %v887 = vadd.f32 %v841, %v886
  %888 = vmatmul.f32.gmra.mxu0 %v858
  %v889 = vpop.f32.mrf.mxu0
  %v890 = vadd.f32 %v846, %v889
  %891 = vdwg.mxu0
  %v892 = vtanh.pop %v881
  %v893 = vtanh.pop %v884
  %v894 = vtanh.pop %v887
  %v895 = vtanh.pop %v890
  %s896 = scalar_lea.vmem %s3, 28
  %v897 = vld [vmem:[%s896] sm:$0xf]
  %s898 = scalar_lea.vmem %s4, 28
  %v899 = vld [vmem:[%s898] sm:$0xf]
  %901 = vset.pattern.permute.xlu0 0
  %902 = vperm.xlu0 %901, %v899
  %v903 = vpop.permute.xlu0 %902
  %v906 = vsel %vm106, %v897, 0
  %908 = vmatpush.msra.mxu0 0.0
  %909 = vmatpush.msra.mxu0 0.0
  %910 = vmatpush.msra.mxu0 0.0
  %911 = vmatpush.msra.mxu0 0.0
  %912 = vmatpush.msra.mxu0 0.0
  %913 = vmatpush.msra.mxu0 0.0
  %914 = vmatpush.msra.mxu0 0.0
  %915 = vmatpush.msra.mxu0 0.0
  %916 = vmatpush.msra.mxu0 0.0
  %917 = vmatpush.msra.mxu0 0.0
  %918 = vmatpush.msra.mxu0 0.0
  %919 = vmatpush.msra.mxu0 0.0
  %920 = vmatpush.msra.mxu0 %v895
  %921 = vmatpush.msra.mxu0 %v894
  %922 = vmatpush.msra.mxu0 %v893
  %923 = vmatpush.msra.mxu0 %v892
  %924 = vmatmul.f32.gmra.mxu0 %v906
  %v925 = vpop.f32.mrf.mxu0
  %v926 = vadd.f32 %v903, %v925
  %927 = vdwg.mxu0
  %v928 = vld [vmem:[%s0 + $0x20] sm:$0xf]
  %v929 = vsub.f32 %v928, %v814
  %v930 = vmul.f32 %v926, %v929
  %v931 = vadd.f32 %v817, %v930
  %s932 = scalar_lea.vmem %s1, 256
  %v933 = vld [vmem:[%s932] sm:$0xff]
  %v934 = vld [vmem:[%s932 + $0x8] sm:$0xff]
  %v935 = vld [vmem:[%s932 + $0x10] sm:$0xff]
  %v936 = vld [vmem:[%s932 + $0x18] sm:$0xff]
  %s937 = scalar_lea.vmem %s2, 256
  %v938 = vld [vmem:[%s937] sm:$0xff]
  %v939 = vld [vmem:[%s937 + $0x8] sm:$0xff]
  %v940 = vld [vmem:[%s937 + $0x10] sm:$0xff]
  %v941 = vld [vmem:[%s937 + $0x18] sm:$0xff]
  %943 = vset.pattern.permute.xlu0 0
  %944 = vperm.xlu0 %943, %v938
  %v945 = vpop.permute.xlu0 %944
  %948 = vset.pattern.permute.xlu0 0
  %949 = vperm.xlu0 %948, %v939
  %v950 = vpop.permute.xlu0 %949
  %953 = vset.pattern.permute.xlu0 0
  %954 = vperm.xlu0 %953, %v940
  %v955 = vpop.permute.xlu0 %954
  %958 = vset.pattern.permute.xlu0 0
  %959 = vperm.xlu0 %958, %v941
  %v960 = vpop.permute.xlu0 %959
  %v963 = vsel %vm49, %v933, 0
  %v966 = vsel %vm49, %v934, 0
  %v969 = vsel %vm49, %v935, 0
  %v972 = vsel %vm49, %v936, 0
  %v975 = vsel %vm62, %v928, 0
  %977 = vmatpush.msra.mxu0 0.0
  %978 = vmatpush.msra.mxu0 0.0
  %979 = vmatpush.msra.mxu0 0.0
  %980 = vmatpush.msra.mxu0 0.0
  %981 = vmatpush.msra.mxu0 0.0
  %982 = vmatpush.msra.mxu0 0.0
  %983 = vmatpush.msra.mxu0 0.0
  %984 = vmatpush.msra.mxu0 0.0
  %985 = vmatpush.msra.mxu0 0.0
  %986 = vmatpush.msra.mxu0 0.0
  %987 = vmatpush.msra.mxu0 0.0
  %988 = vmatpush.msra.mxu0 0.0
  %989 = vmatpush.msra.mxu0 0.0
  %990 = vmatpush.msra.mxu0 0.0
  %991 = vmatpush.msra.mxu0 0.0
  %992 = vmatpush.msra.mxu0 %v975
  %993 = vmatmul.f32.gmra.mxu0 %v963
  %v994 = vpop.f32.mrf.mxu0
  %v995 = vadd.f32 %v945, %v994
  %996 = vmatmul.f32.gmra.mxu0 %v966
  %v997 = vpop.f32.mrf.mxu0
  %v998 = vadd.f32 %v950, %v997
  %999 = vmatmul.f32.gmra.mxu0 %v969
  %v1000 = vpop.f32.mrf.mxu0
  %v1001 = vadd.f32 %v955, %v1000
  %1002 = vmatmul.f32.gmra.mxu0 %v972
  %v1003 = vpop.f32.mrf.mxu0
  %v1004 = vadd.f32 %v960, %v1003
  %1005 = vdwg.mxu0
  %v1006 = vtanh.pop %v995
  %v1007 = vtanh.pop %v998
  %v1008 = vtanh.pop %v1001
  %v1009 = vtanh.pop %v1004
  %s1010 = scalar_lea.vmem %s3, 32
  %v1011 = vld [vmem:[%s1010] sm:$0xf]
  %s1012 = scalar_lea.vmem %s4, 32
  %v1013 = vld [vmem:[%s1012] sm:$0xf]
  %1015 = vset.pattern.permute.xlu0 0
  %1016 = vperm.xlu0 %1015, %v1013
  %v1017 = vpop.permute.xlu0 %1016
  %v1020 = vsel %vm106, %v1011, 0
  %1022 = vmatpush.msra.mxu0 0.0
  %1023 = vmatpush.msra.mxu0 0.0
  %1024 = vmatpush.msra.mxu0 0.0
  %1025 = vmatpush.msra.mxu0 0.0
  %1026 = vmatpush.msra.mxu0 0.0
  %1027 = vmatpush.msra.mxu0 0.0
  %1028 = vmatpush.msra.mxu0 0.0
  %1029 = vmatpush.msra.mxu0 0.0
  %1030 = vmatpush.msra.mxu0 0.0
  %1031 = vmatpush.msra.mxu0 0.0
  %1032 = vmatpush.msra.mxu0 0.0
  %1033 = vmatpush.msra.mxu0 0.0
  %1034 = vmatpush.msra.mxu0 %v1009
  %1035 = vmatpush.msra.mxu0 %v1008
  %1036 = vmatpush.msra.mxu0 %v1007
  %1037 = vmatpush.msra.mxu0 %v1006
  %1038 = vmatmul.f32.gmra.mxu0 %v1020
  %v1039 = vpop.f32.mrf.mxu0
  %v1040 = vadd.f32 %v1017, %v1039
  %1041 = vdwg.mxu0
  %v1042 = vld [vmem:[%s0 + $0x24] sm:$0xf]
  %v1043 = vsub.f32 %v1042, %v928
  %v1044 = vmul.f32 %v1040, %v1043
  %v1045 = vadd.f32 %v931, %v1044
  %s1046 = scalar_lea.vmem %s1, 288
  %v1047 = vld [vmem:[%s1046] sm:$0xff]
  %v1048 = vld [vmem:[%s1046 + $0x8] sm:$0xff]
  %v1049 = vld [vmem:[%s1046 + $0x10] sm:$0xff]
  %v1050 = vld [vmem:[%s1046 + $0x18] sm:$0xff]
  %s1051 = scalar_lea.vmem %s2, 288
  %v1052 = vld [vmem:[%s1051] sm:$0xff]
  %v1053 = vld [vmem:[%s1051 + $0x8] sm:$0xff]
  %v1054 = vld [vmem:[%s1051 + $0x10] sm:$0xff]
  %v1055 = vld [vmem:[%s1051 + $0x18] sm:$0xff]
  %1057 = vset.pattern.permute.xlu0 0
  %1058 = vperm.xlu0 %1057, %v1052
  %v1059 = vpop.permute.xlu0 %1058
  %1062 = vset.pattern.permute.xlu0 0
  %1063 = vperm.xlu0 %1062, %v1053
  %v1064 = vpop.permute.xlu0 %1063
  %1067 = vset.pattern.permute.xlu0 0
  %1068 = vperm.xlu0 %1067, %v1054
  %v1069 = vpop.permute.xlu0 %1068
  %1072 = vset.pattern.permute.xlu0 0
  %1073 = vperm.xlu0 %1072, %v1055
  %v1074 = vpop.permute.xlu0 %1073
  %v1077 = vsel %vm49, %v1047, 0
  %v1080 = vsel %vm49, %v1048, 0
  %v1083 = vsel %vm49, %v1049, 0
  %v1086 = vsel %vm49, %v1050, 0
  %v1089 = vsel %vm62, %v1042, 0
  %1091 = vmatpush.msra.mxu0 0.0
  %1092 = vmatpush.msra.mxu0 0.0
  %1093 = vmatpush.msra.mxu0 0.0
  %1094 = vmatpush.msra.mxu0 0.0
  %1095 = vmatpush.msra.mxu0 0.0
  %1096 = vmatpush.msra.mxu0 0.0
  %1097 = vmatpush.msra.mxu0 0.0
  %1098 = vmatpush.msra.mxu0 0.0
  %1099 = vmatpush.msra.mxu0 0.0
  %1100 = vmatpush.msra.mxu0 0.0
  %1101 = vmatpush.msra.mxu0 0.0
  %1102 = vmatpush.msra.mxu0 0.0
  %1103 = vmatpush.msra.mxu0 0.0
  %1104 = vmatpush.msra.mxu0 0.0
  %1105 = vmatpush.msra.mxu0 0.0
  %1106 = vmatpush.msra.mxu0 %v1089
  %1107 = vmatmul.f32.gmra.mxu0 %v1077
  %v1108 = vpop.f32.mrf.mxu0
  %v1109 = vadd.f32 %v1059, %v1108
  %1110 = vmatmul.f32.gmra.mxu0 %v1080
  %v1111 = vpop.f32.mrf.mxu0
  %v1112 = vadd.f32 %v1064, %v1111
  %1113 = vmatmul.f32.gmra.mxu0 %v1083
  %v1114 = vpop.f32.mrf.mxu0
  %v1115 = vadd.f32 %v1069, %v1114
  %1116 = vmatmul.f32.gmra.mxu0 %v1086
  %v1117 = vpop.f32.mrf.mxu0
  %v1118 = vadd.f32 %v1074, %v1117
  %1119 = vdwg.mxu0
  %v1120 = vtanh.pop %v1109
  %v1121 = vtanh.pop %v1112
  %v1122 = vtanh.pop %v1115
  %v1123 = vtanh.pop %v1118
  %s1124 = scalar_lea.vmem %s3, 36
  %v1125 = vld [vmem:[%s1124] sm:$0xf]
  %s1126 = scalar_lea.vmem %s4, 36
  %v1127 = vld [vmem:[%s1126] sm:$0xf]
  %1129 = vset.pattern.permute.xlu0 0
  %1130 = vperm.xlu0 %1129, %v1127
  %v1131 = vpop.permute.xlu0 %1130
  %v1134 = vsel %vm106, %v1125, 0
  %1136 = vmatpush.msra.mxu0 0.0
  %1137 = vmatpush.msra.mxu0 0.0
  %1138 = vmatpush.msra.mxu0 0.0
  %1139 = vmatpush.msra.mxu0 0.0
  %1140 = vmatpush.msra.mxu0 0.0
  %1141 = vmatpush.msra.mxu0 0.0
  %1142 = vmatpush.msra.mxu0 0.0
  %1143 = vmatpush.msra.mxu0 0.0
  %1144 = vmatpush.msra.mxu0 0.0
  %1145 = vmatpush.msra.mxu0 0.0
  %1146 = vmatpush.msra.mxu0 0.0
  %1147 = vmatpush.msra.mxu0 0.0
  %1148 = vmatpush.msra.mxu0 %v1123
  %1149 = vmatpush.msra.mxu0 %v1122
  %1150 = vmatpush.msra.mxu0 %v1121
  %1151 = vmatpush.msra.mxu0 %v1120
  %1152 = vmatmul.f32.gmra.mxu0 %v1134
  %v1153 = vpop.f32.mrf.mxu0
  %v1154 = vadd.f32 %v1131, %v1153
  %1155 = vdwg.mxu0
  %v1156 = vld [vmem:[%s0 + $0x28] sm:$0xf]
  %v1157 = vsub.f32 %v1156, %v1042
  %v1158 = vmul.f32 %v1154, %v1157
  %v1159 = vadd.f32 %v1045, %v1158
  %v1161 = vrot.slane %v1159, 4
  %v1163 = vsel %vm62, %v1156, %v1161
  %1164 = vst [vmem:[%s5] sm:$0xff] %v1163
  // Predicated region
  $region22: #{_lambda_.1} parent=0 // pred_check
    _
  $region23: #{_lambda_.1} parent=0 // pred_check_branch
    %1166 = sbr.rel (0) target = $region25
  $region24: #{_lambda_.1} parent=0 // pred_region
    _
  $region25: #{_lambda_.1} parent=0 // pred_fallthru
    _
  // Predicated region
  $region26: #{_lambda_.1} parent=0 // pred_check
    _
  $region27: #{_lambda_.1} parent=0 // pred_check_branch
    %1168 = sbr.rel (0) target = $region29
  $region28: #{_lambda_.1} parent=0 // pred_region
    _
  $region29: #{_lambda_.1} parent=0 // pred_fallthru
    _

</llo_original>
